<compile_context>
chip_gen: v6e
topology: v6e:2x2x1
jax: 0.10.0
libtpu: 0.0.40
codegen_flags: <defaults>
</compile_context>

<pallas_src>
import functools

import jax
import jax.numpy as jnp
from jax import lax
from jax.experimental import pallas as pl
from jax.experimental.pallas import tpu as pltpu

_LANE = 128      # lane width (last dim)
_SUB = 8         # sublane granularity


def _round_up(x, m):
    return (x + m - 1) // m * m


# ----------------------------- Pallas kernel --------------------------------
def _lm_kernel(seq_len, tb, ids_ref, tbl_ref, w1_ref, b1_ref, w2_ref, b2_ref,
               out_ref):
    """One grid step == TB batch elements (all their tokens at once).

    ids_ref : (TB*S, 1)        int32 token ids (batch-major, seq-minor)
    tbl_ref : (V_pad, H_pad)   bf16 embedding table
    w1_ref  : (H_pad, F_pad)   bf16 feature-MLP weight
    b1_ref  : (1, F_pad)       f32  feature-MLP bias
    w2_ref  : (F_pad, C_pad)   bf16 classifier weight
    b2_ref  : (1, C_pad)       f32  classifier bias
    out_ref : (TB, C_pad)      f32  logits
    """
    tm = ids_ref.shape[0]                      # TB * S
    v_pad = tbl_ref.shape[0]

    ids = ids_ref[...]                         # (TM, 1) int32
    # In-kernel embedding "gather": one-hot matmul on the MXU (keeps the
    # gathered activations out of HBM entirely).
    iota_v = lax.broadcasted_iota(jnp.int32, (tm, v_pad), 1)
    onehot = jnp.where(ids == iota_v, 1.0, 0.0).astype(jnp.bfloat16)
    emb = jnp.dot(onehot, tbl_ref[...],
                  preferred_element_type=jnp.float32)            # (TM, H_pad)
    emb = emb.astype(jnp.bfloat16)             # lossless: table is bf16

    # FeatureModel hot path: per-token Linear + ReLU, f32 accumulation.
    h = jnp.dot(emb, w1_ref[...], preferred_element_type=jnp.float32)
    h = jnp.maximum(h + b1_ref[...], 0.0)                        # (TM, F_pad)

    # Mean-pool over the sequence axis (per batch row).
    h3 = h.reshape(tb, seq_len, h.shape[-1])                     # (TB, S, F)
    pooled = jnp.sum(h3, axis=1) * (1.0 / seq_len)               # (TB, F_pad)

    # ClassificationModel: linear head (bf16 operands, f32 accumulate).
    logits = jnp.dot(pooled.astype(jnp.bfloat16), w2_ref[...],
                     preferred_element_type=jnp.float32)
    out_ref[...] = logits + b2_ref[...]                          # (TB, C_pad)


# ----------------------------- wrapper ---------------------------------------
def language_model_forward(token_ids, params):
    """token_ids: int32 [B, S].  Returns logits float32 [B, C]."""
    emb_table, w1, b1, w2, b2 = (
        params["emb"], params["w1"], params["b1"], params["w2"], params["b2"]
    )
    B, S = token_ids.shape
    V, H = emb_table.shape
    F = w1.shape[1]
    C = w2.shape[1]

    # Pad every lane axis to 128 (unmasked vld/vst, full MXU K/N occupancy).
    V_pad = _round_up(V, _LANE)
    H_pad = _round_up(H, _LANE)
    F_pad = _round_up(F, _LANE)
    C_pad = _round_up(C, _LANE)

    # Rows per grid step: aim for >=128 flattened token rows per tile so the
    # first matmul fills the MXU M dimension, capped to keep the one-hot tile
    # small.  Batch axis padded to a multiple of TB.
    TB = min(64, max(_SUB, _round_up(-(-128 // S), _SUB)))
    B_pad = _round_up(B, TB)
    TM = TB * S

    tbl_p = jnp.pad(emb_table, ((0, V_pad - V), (0, H_pad - H))).astype(jnp.bfloat16)
    w1_p = jnp.pad(w1, ((0, H_pad - H), (0, F_pad - F))).astype(jnp.bfloat16)
    b1_p = jnp.pad(b1, ((0, 0), (0, F_pad - F))).astype(jnp.float32)
    w2_p = jnp.pad(w2, ((0, F_pad - F), (0, C_pad - C))).astype(jnp.bfloat16)
    b2_p = jnp.pad(b2, ((0, 0), (0, C_pad - C))).astype(jnp.float32)
    ids_p = jnp.pad(token_ids, ((0, B_pad - B), (0, 0)))
    ids_p = ids_p.reshape(B_pad * S, 1).astype(jnp.int32)

    grid = (B_pad // TB,)
    kernel = functools.partial(_lm_kernel, S, TB)

    out = pl.pallas_call(
        kernel,
        out_shape=jax.ShapeDtypeStruct((B_pad, C_pad), jnp.float32),
        grid_spec=pltpu.PrefetchScalarGridSpec(
            num_scalar_prefetch=0,
            grid=grid,
            in_specs=[
                pl.BlockSpec((TM, 1), lambda t: (t, 0)),          # token ids
                pl.BlockSpec((V_pad, H_pad), lambda t: (0, 0)),   # emb table
                pl.BlockSpec((H_pad, F_pad), lambda t: (0, 0)),   # w1
                pl.BlockSpec((1, F_pad), lambda t: (0, 0)),       # b1
                pl.BlockSpec((F_pad, C_pad), lambda t: (0, 0)),   # w2
                pl.BlockSpec((1, C_pad), lambda t: (0, 0)),       # b2
            ],
            out_specs=pl.BlockSpec((TB, C_pad), lambda t: (t, 0)),
        ),
        compiler_params=pltpu.CompilerParams(
            dimension_semantics=("parallel",),
        ),
    )(ids_p, tbl_p, w1_p, b1_p, w2_p, b2_p)

    return out[:B, :C]


# ----------------------------- reference (pure JAX) --------------------------
def _reference_forward(token_ids, params):
    # Mirrors the kernel's bf16 operand / f32 accumulation numerics.
    tbl = params["emb"].astype(jnp.bfloat16)
    w1 = params["w1"].astype(jnp.bfloat16).astype(jnp.float32)
    w2 = params["w2"].astype(jnp.bfloat16).astype(jnp.float32)
    emb = jnp.take(tbl, token_ids, axis=0).astype(jnp.float32)     # (B,S,H)
    h = jnp.maximum(jnp.einsum("bsh,hf->bsf", emb, w1) + params["b1"], 0.0)
    pooled = jnp.mean(h, axis=1)
    pooled = pooled.astype(jnp.bfloat16).astype(jnp.float32)
    return pooled @ w2 + params["b2"]


# ----------------------------- main ------------------------------------------
if __name__ == "__main__":
    # Small synthetic shapes consistent with a language-model head.
    B, S = 2, 8          # batch, sequence length
    V = 64               # vocab size
    H = 32               # embedding / hidden size
    F = 64               # feature-MLP width
    C = 16               # number of output classes

    key = jax.random.PRNGKey(0)
    k_emb, k_w1, k_b1, k_w2, k_b2, k_x = jax.random.split(key, 6)

    params = {
        "emb": jax.random.normal(k_emb, (V, H), jnp.float32) * 0.02,
        "w1":  jax.random.normal(k_w1, (H, F), jnp.float32) * (1.0 / H ** 0.5),
        "b1":  jax.random.normal(k_b1, (1, F), jnp.float32) * 0.01,
        "w2":  jax.random.normal(k_w2, (F, C), jnp.float32) * (1.0 / F ** 0.5),
        "b2":  jax.random.normal(k_b2, (1, C), jnp.float32) * 0.01,
    }

    token_ids = jax.random.randint(k_x, (B, S), 0, V, dtype=jnp.int32)

    logits = language_model_forward(token_ids, params)
    logits = jax.block_until_ready(logits)

    # Sanity check against a pure-JAX reference (bf16 operands -> looser tol).
    ref = jax.block_until_ready(_reference_forward(token_ids, params))
    assert logits.shape == (B, C)
    assert jnp.allclose(logits, ref, atol=2e-3, rtol=2e-3), (
        jnp.max(jnp.abs(logits - ref)))

    print("KERNEL_OK")
</pallas_src>

<mosaic_0001>
module attributes {stable_mosaic.version = 11 : i64} {
  func.func @_lm_kernel(%arg0: i32, %arg1: memref<128x1xi32, #tpu.memory_space<vmem>>, %arg2: memref<128x128xbf16, #tpu.memory_space<vmem>>, %arg3: memref<128x128xbf16, #tpu.memory_space<vmem>>, %arg4: memref<1x128xf32, #tpu.memory_space<vmem>>, %arg5: memref<128x128xbf16, #tpu.memory_space<vmem>>, %arg6: memref<1x128xf32, #tpu.memory_space<vmem>>, %arg7: memref<16x128xf32, #tpu.memory_space<vmem>>) attributes {dimension_semantics = [#tpu.dimension_semantics<parallel>], iteration_bounds = array<i64: 1>, scalar_prefetch = 0 : i64, scratch_operands = 0 : i64, tpu.core_type = #tpu.core_type<tc>, window_params = [{transform_indices = @transform_0, window_bounds = array<i64: 128, 1>}, {pipeline_mode = #tpu.pipeline_mode<synchronous>, transform_indices = @transform_1, window_bounds = array<i64: 128, 128>}, {pipeline_mode = #tpu.pipeline_mode<synchronous>, transform_indices = @transform_2, window_bounds = array<i64: 128, 128>}, {pipeline_mode = #tpu.pipeline_mode<synchronous>, transform_indices = @transform_3, window_bounds = array<i64: 1, 128>}, {pipeline_mode = #tpu.pipeline_mode<synchronous>, transform_indices = @transform_4, window_bounds = array<i64: 128, 128>}, {pipeline_mode = #tpu.pipeline_mode<synchronous>, transform_indices = @transform_5, window_bounds = array<i64: 1, 128>}, {transform_indices = @transform_6, window_bounds = array<i64: 16, 128>}]} {
    %c0 = arith.constant 0 : index
    %c0_0 = arith.constant 0 : index
    %0 = vector.load %arg1[%c0, %c0_0] : memref<128x1xi32, #tpu.memory_space<vmem>>, vector<128x1xi32>
    %1 = tpu.iota {dimensions = array<i32: 1>} : vector<128x128xi32>
    %2 = vector.broadcast %0 : vector<128x1xi32> to vector<128x128xi32>
    %3 = arith.cmpi eq, %2, %1 : vector<128x128xi32>
    %cst = arith.constant 1.000000e+00 : f32
    %cst_1 = arith.constant 0.000000e+00 : f32
    %4 = vector.broadcast %cst : f32 to vector<128x128xf32>
    %5 = vector.broadcast %cst_1 : f32 to vector<128x128xf32>
    %6 = arith.select %3, %4, %5 : vector<128x128xi1>, vector<128x128xf32>
    %7 = arith.truncf %6 : vector<128x128xf32> to vector<128x128xbf16>
    %c0_2 = arith.constant 0 : index
    %c0_3 = arith.constant 0 : index
    %8 = vector.load %arg2[%c0_2, %c0_3] : memref<128x128xbf16, #tpu.memory_space<vmem>>, vector<128x128xbf16>
    %cst_4 = arith.constant dense<0.000000e+00> : vector<128x128xf32>
    %9 = tpu.matmul %7, %8, %cst_4 {dimension_numbers = #tpu.dot_dimension_numbers<[1], [0], [0], [1], [0, 0, 1, 1], [], []>} : vector<128x128xbf16>, vector<128x128xbf16>, vector<128x128xf32> -> vector<128x128xf32>
    %10 = arith.truncf %9 : vector<128x128xf32> to vector<128x128xbf16>
    %c0_5 = arith.constant 0 : index
    %c0_6 = arith.constant 0 : index
    %11 = vector.load %arg3[%c0_5, %c0_6] : memref<128x128xbf16, #tpu.memory_space<vmem>>, vector<128x128xbf16>
    %cst_7 = arith.constant dense<0.000000e+00> : vector<128x128xf32>
    %12 = tpu.matmul %10, %11, %cst_7 {dimension_numbers = #tpu.dot_dimension_numbers<[1], [0], [0], [1], [0, 0, 1, 1], [], []>} : vector<128x128xbf16>, vector<128x128xbf16>, vector<128x128xf32> -> vector<128x128xf32>
    %c0_8 = arith.constant 0 : index
    %c0_9 = arith.constant 0 : index
    %13 = vector.load %arg4[%c0_8, %c0_9] : memref<1x128xf32, #tpu.memory_space<vmem>>, vector<1x128xf32>
    %14 = vector.broadcast %13 : vector<1x128xf32> to vector<128x128xf32>
    %15 = arith.addf %12, %14 : vector<128x128xf32>
    %cst_10 = arith.constant 0.000000e+00 : f32
    %16 = vector.broadcast %cst_10 : f32 to vector<128x128xf32>
    %17 = arith.maximumf %15, %16 : vector<128x128xf32>
    %18 = vector.shape_cast %17 : vector<128x128xf32> to vector<16x8x128xf32>
    %cst_11 = arith.constant dense<0.000000e+00> : vector<16x128xf32>
    %19 = vector.multi_reduction <add>, %18, %cst_11 [1] : vector<16x8x128xf32> to vector<16x128xf32>
    %cst_12 = arith.constant 1.250000e-01 : f32
    %20 = vector.broadcast %cst_12 : f32 to vector<16x128xf32>
    %21 = arith.mulf %19, %20 : vector<16x128xf32>
    %22 = arith.truncf %21 : vector<16x128xf32> to vector<16x128xbf16>
    %c0_13 = arith.constant 0 : index
    %c0_14 = arith.constant 0 : index
    %23 = vector.load %arg5[%c0_13, %c0_14] : memref<128x128xbf16, #tpu.memory_space<vmem>>, vector<128x128xbf16>
    %cst_15 = arith.constant dense<0.000000e+00> : vector<16x128xf32>
    %24 = tpu.matmul %22, %23, %cst_15 {dimension_numbers = #tpu.dot_dimension_numbers<[1], [0], [0], [1], [0, 0, 1, 1], [], []>} : vector<16x128xbf16>, vector<128x128xbf16>, vector<16x128xf32> -> vector<16x128xf32>
    %c0_16 = arith.constant 0 : index
    %c0_17 = arith.constant 0 : index
    %25 = vector.load %arg6[%c0_16, %c0_17] : memref<1x128xf32, #tpu.memory_space<vmem>>, vector<1x128xf32>
    %26 = vector.broadcast %25 : vector<1x128xf32> to vector<16x128xf32>
    %27 = arith.addf %24, %26 : vector<16x128xf32>
    %c0_18 = arith.constant 0 : index
    %c0_19 = arith.constant 0 : index
    %28 = vector.load %arg7[%c0_18, %c0_19] : memref<16x128xf32, #tpu.memory_space<vmem>>, vector<16x128xf32>
    tpu.vector_store %arg7[%c0_18, %c0_19], %27 {strides = array<i32>} : memref<16x128xf32, #tpu.memory_space<vmem>>, vector<16x128xf32>,
    return
  }
  func.func @transform_0(%arg0: i32) -> (i32, i32) {
    %c0_i32 = arith.constant 0 : i32
    %c0_i32_0 = arith.constant 0 : i32
    return %arg0, %c0_i32 : i32, i32
  }
  func.func @transform_1(%arg0: i32) -> (i32, i32) {
    %c0_i32 = arith.constant 0 : i32
    %c0_i32_0 = arith.constant 0 : i32
    %c0_i32_1 = arith.constant 0 : i32
    return %c0_i32, %c0_i32_0 : i32, i32
  }
  func.func @transform_2(%arg0: i32) -> (i32, i32) {
    %c0_i32 = arith.constant 0 : i32
    %c0_i32_0 = arith.constant 0 : i32
    %c0_i32_1 = arith.constant 0 : i32
    return %c0_i32, %c0_i32_0 : i32, i32
  }
  func.func @transform_3(%arg0: i32) -> (i32, i32) {
    %c0_i32 = arith.constant 0 : i32
    %c0_i32_0 = arith.constant 0 : i32
    %c0_i32_1 = arith.constant 0 : i32
    return %c0_i32, %c0_i32_0 : i32, i32
  }
  func.func @transform_4(%arg0: i32) -> (i32, i32) {
    %c0_i32 = arith.constant 0 : i32
    %c0_i32_0 = arith.constant 0 : i32
    %c0_i32_1 = arith.constant 0 : i32
    return %c0_i32, %c0_i32_0 : i32, i32
  }
  func.func @transform_5(%arg0: i32) -> (i32, i32) {
    %c0_i32 = arith.constant 0 : i32
    %c0_i32_0 = arith.constant 0 : i32
    %c0_i32_1 = arith.constant 0 : i32
    return %c0_i32, %c0_i32_0 : i32, i32
  }
  func.func @transform_6(%arg0: i32) -> (i32, i32) {
    %c0_i32 = arith.constant 0 : i32
    %c0_i32_0 = arith.constant 0 : i32
    return %arg0, %c0_i32 : i32, i32
  }
}

</mosaic_0001>

<llo_original>
// kernel: tpu_custom_call.1
$region0: #{tpu_custom_call.1}
  #allocation0 [shape = 'u32[]', space=smem, size = 0x4, offset = 0x4, fixed_abs, tag = 'smem constant byte address 0x4 - core index']
  #allocation1 [shape = 'u32[144,128]{1,0:T(1,128)}', space=vmem, size = 0x12000, scoped, tag = 'internal scratch']
  %s0 = inlined_call_operand.vmem [shape: s32[128,1], index: 0, kind: input, shape index: {}]
  %s1 = inlined_call_operand.vmem [shape: bf16[128,128], index: 1, kind: input, shape index: {}]
  %s2 = inlined_call_operand.vmem [shape: bf16[128,128], index: 2, kind: input, shape index: {}]
  %s3 = inlined_call_operand.vmem [shape: f32[1,128], index: 3, kind: input, shape index: {}]
  %s4 = inlined_call_operand.hbm [shape: bf16[128,128], index: 4, kind: input, shape index: {}]
  %s5 = inlined_call_operand.vmem [shape: f32[1,128], index: 5, kind: input, shape index: {}]
  %s6 = inlined_call_operand.hbm [shape: f32[16,128], index: 6, kind: output, shape index: {}]
  %s7 = sld [smem:[#allocation0]]
  $region38: #{tpu_custom_call.1} parent=0
    _
  %s9 = ssub.s32 1, %s7
  %s10 = scalar_select 0, %s9, %s7
  $region1: #{tpu_custom_call.1} parent=0
    #allocation2 [shape = 'u8[32768]{0}', space=vmem, size = 0x8000, scoped, tag = 'input window, operand 4, single buffered']
    #allocation3 [shape = 's32[1]{0}', space=sflag, size = 0x4, scoped, tag = 'scoped memory for tpu_custom_call.1']
    #allocation4 [shape = 's32[1]{0}', space=sflag, size = 0x4, scoped, tag = 'scoped memory for tpu_custom_call.1']
    #allocation5 [shape = 'u8[8192]{0}', space=vmem, size = 0x2000, scoped, tag = 'output window, operand 0, single buffered']
    %11 = vsyncpa [#allocation3], 0
    %12 = vsyncpa [#allocation4], 0
    // Predicated region
    $region2: #{tpu_custom_call.1} parent=1 // pred_check
      _
    $region3: #{tpu_custom_call.1} parent=1 // pred_check_branch
      %14 = sbr.rel (0) target = $region5
    $region4: #{tpu_custom_call.1} parent=1 // pred_region
      _
    $region5: #{tpu_custom_call.1} parent=1 // pred_fallthru
      _
    // Predicated region
    $region6: #{tpu_custom_call.1} parent=1 // pred_check
      _
    $region7: #{tpu_custom_call.1} parent=1 // pred_check_branch
      %16 = sbr.rel (0) target = $region9
    $region8: #{tpu_custom_call.1} parent=1 // pred_region
      _
    $region9: #{tpu_custom_call.1} parent=1 // pred_fallthru
      _
    // Predicated region
    $region10: #{tpu_custom_call.1} parent=1 // pred_check
      _
    $region11: #{tpu_custom_call.1} parent=1 // pred_check_branch
      %18 = sbr.rel (0) target = $region13
    $region12: #{tpu_custom_call.1} parent=1 // pred_region
      _
    $region13: #{tpu_custom_call.1} parent=1 // pred_fallthru
      _
    // Predicated region
    $region14: #{tpu_custom_call.1} parent=1 // pred_check
      _
    $region15: #{tpu_custom_call.1} parent=1 // pred_check_branch
      %20 = sbr.rel (0) target = $region17
    $region16: #{tpu_custom_call.1} parent=1 // pred_region
      _
    $region17: #{tpu_custom_call.1} parent=1 // pred_fallthru
      _
    // Predicated region
    $region18: #{tpu_custom_call.1} parent=1 // pred_check
      _
    $region19: #{tpu_custom_call.1} parent=1 // pred_check_branch
      %22 = sbr.rel (0) target = $region21
    $region20: #{tpu_custom_call.1} parent=1 // pred_region
      %s24 = ssub.s32 1024, 1024
      %25 = vsyncadd [#allocation3], %s24
      %s26 = sshll.u32 [#allocation2], 4
      %s27 = int_to_ptr.vmem [resolvable:$true] %s26
      %32 = dma.hbm_to_vmem [thread:$0]  %s4, 1024, %s27, [#allocation3], 64, 64, 4
    $region21: #{tpu_custom_call.1} parent=1 // pred_fallthru
      _
    // Predicated region
    $region22: #{tpu_custom_call.1} parent=1 // pred_check
      _
    $region23: #{tpu_custom_call.1} parent=1 // pred_check_branch
      %34 = sbr.rel (0) target = $region25
    $region24: #{tpu_custom_call.1} parent=1 // pred_region
      _
    $region25: #{tpu_custom_call.1} parent=1 // pred_fallthru
      _
    // Predicated region
    $region26: #{tpu_custom_call.1} parent=1 // pred_check
      _
    $region27: #{tpu_custom_call.1} parent=1 // pred_check_branch
      %36 = sbr.rel (0) target = $region29
    $region28: #{tpu_custom_call.1} parent=1 // pred_region
      %37 = dma.done [#allocation3], 1024
    $region29: #{tpu_custom_call.1} parent=1 // pred_fallthru
      _
    %v39 = vld [vmem:[%s0] sm:$0xff]
    %v40 = vld [vmem:[%s0 + $0x8] sm:$0xff]
    %v41 = vld [vmem:[%s0 + $0x10] sm:$0xff]
    %v42 = vld [vmem:[%s0 + $0x18] sm:$0xff]
    %v43 = vld [vmem:[%s0 + $0x20] sm:$0xff]
    %v44 = vld [vmem:[%s0 + $0x28] sm:$0xff]
    %v45 = vld [vmem:[%s0 + $0x30] sm:$0xff]
    %v46 = vld [vmem:[%s0 + $0x38] sm:$0xff]
    %v47 = vld [vmem:[%s0 + $0x40] sm:$0xff]
    %v48 = vld [vmem:[%s0 + $0x48] sm:$0xff]
    %v49 = vld [vmem:[%s0 + $0x50] sm:$0xff]
    %v50 = vld [vmem:[%s0 + $0x58] sm:$0xff]
    %v51 = vld [vmem:[%s0 + $0x60] sm:$0xff]
    %v52 = vld [vmem:[%s0 + $0x68] sm:$0xff]
    %v53 = vld [vmem:[%s0 + $0x70] sm:$0xff]
    %v54 = vld [vmem:[%s0 + $0x78] sm:$0xff]
    %v55 = vlaneseq
    %v56 = vand.u32 %v55, 127
    %57 = vset.pattern.permute.xlu0 0
    %58 = vperm.xlu0 %57, %v39
    %v59 = vpop.permute.xlu0 %58
    %60 = vset.pattern.permute.xlu0 0
    %61 = vperm.xlu0 %60, %v40
    %v62 = vpop.permute.xlu0 %61
    %63 = vset.pattern.permute.xlu0 0
    %64 = vperm.xlu0 %63, %v41
    %v65 = vpop.permute.xlu0 %64
    %66 = vset.pattern.permute.xlu0 0
    %67 = vperm.xlu0 %66, %v42
    %v68 = vpop.permute.xlu0 %67
    %69 = vset.pattern.permute.xlu0 0
    %70 = vperm.xlu0 %69, %v43
    %v71 = vpop.permute.xlu0 %70
    %72 = vset.pattern.permute.xlu0 0
    %73 = vperm.xlu0 %72, %v44
    %v74 = vpop.permute.xlu0 %73
    %75 = vset.pattern.permute.xlu0 0
    %76 = vperm.xlu0 %75, %v45
    %v77 = vpop.permute.xlu0 %76
    %78 = vset.pattern.permute.xlu0 0
    %79 = vperm.xlu0 %78, %v46
    %v80 = vpop.permute.xlu0 %79
    %81 = vset.pattern.permute.xlu0 0
    %82 = vperm.xlu0 %81, %v47
    %v83 = vpop.permute.xlu0 %82
    %84 = vset.pattern.permute.xlu0 0
    %85 = vperm.xlu0 %84, %v48
    %v86 = vpop.permute.xlu0 %85
    %87 = vset.pattern.permute.xlu0 0
    %88 = vperm.xlu0 %87, %v49
    %v89 = vpop.permute.xlu0 %88
    %90 = vset.pattern.permute.xlu0 0
    %91 = vperm.xlu0 %90, %v50
    %v92 = vpop.permute.xlu0 %91
    %93 = vset.pattern.permute.xlu0 0
    %94 = vperm.xlu0 %93, %v51
    %v95 = vpop.permute.xlu0 %94
    %96 = vset.pattern.permute.xlu0 0
    %97 = vperm.xlu0 %96, %v52
    %v98 = vpop.permute.xlu0 %97
    %99 = vset.pattern.permute.xlu0 0
    %100 = vperm.xlu0 %99, %v53
    %v101 = vpop.permute.xlu0 %100
    %102 = vset.pattern.permute.xlu0 0
    %103 = vperm.xlu0 %102, %v54
    %v104 = vpop.permute.xlu0 %103
    %vm105 = vcmp.eq.s32.totalorder %v59, %v56
    %vm106 = vcmp.eq.s32.totalorder %v62, %v56
    %vm107 = vcmp.eq.s32.totalorder %v65, %v56
    %vm108 = vcmp.eq.s32.totalorder %v68, %v56
    %vm109 = vcmp.eq.s32.totalorder %v71, %v56
    %vm110 = vcmp.eq.s32.totalorder %v74, %v56
    %vm111 = vcmp.eq.s32.totalorder %v77, %v56
    %vm112 = vcmp.eq.s32.totalorder %v80, %v56
    %vm113 = vcmp.eq.s32.totalorder %v83, %v56
    %vm114 = vcmp.eq.s32.totalorder %v86, %v56
    %vm115 = vcmp.eq.s32.totalorder %v89, %v56
    %vm116 = vcmp.eq.s32.totalorder %v92, %v56
    %vm117 = vcmp.eq.s32.totalorder %v95, %v56
    %vm118 = vcmp.eq.s32.totalorder %v98, %v56
    %vm119 = vcmp.eq.s32.totalorder %v101, %v56
    %vm120 = vcmp.eq.s32.totalorder %v104, %v56
    %v121 = vsel %vm105, 1.0, 0.0
    %v122 = vsel %vm106, 1.0, 0.0
    %v123 = vsel %vm107, 1.0, 0.0
    %v124 = vsel %vm108, 1.0, 0.0
    %v125 = vsel %vm109, 1.0, 0.0
    %v126 = vsel %vm110, 1.0, 0.0
    %v127 = vsel %vm111, 1.0, 0.0
    %v128 = vsel %vm112, 1.0, 0.0
    %v129 = vsel %vm113, 1.0, 0.0
    %v130 = vsel %vm114, 1.0, 0.0
    %v131 = vsel %vm115, 1.0, 0.0
    %v132 = vsel %vm116, 1.0, 0.0
    %v133 = vsel %vm117, 1.0, 0.0
    %v134 = vsel %vm118, 1.0, 0.0
    %v135 = vsel %vm119, 1.0, 0.0
    %v136 = vsel %vm120, 1.0, 0.0
    %v137 = vpack.c.bf16 %v122, %v121
    %v138 = vpack.c.bf16 %v124, %v123
    %v139 = vpack.c.bf16 %v126, %v125
    %v140 = vpack.c.bf16 %v128, %v127
    %v141 = vpack.c.bf16 %v130, %v129
    %v142 = vpack.c.bf16 %v132, %v131
    %v143 = vpack.c.bf16 %v134, %v133
    %v144 = vpack.c.bf16 %v136, %v135
    %v145 = vld [vmem:[%s1] sm:$0xf]
    %v146 = vld [vmem:[%s1 + $0x4] sm:$0xf]
    %v147 = vld [vmem:[%s1 + $0x8] sm:$0xf]
    %v148 = vld [vmem:[%s1 + $0xc] sm:$0xf]
    %v149 = vld [vmem:[%s1 + $0x10] sm:$0xf]
    %v150 = vld [vmem:[%s1 + $0x14] sm:$0xf]
    %v151 = vld [vmem:[%s1 + $0x18] sm:$0xf]
    %v152 = vld [vmem:[%s1 + $0x1c] sm:$0xf]
    %v153 = vld [vmem:[%s1 + $0x20] sm:$0xf]
    %v154 = vld [vmem:[%s1 + $0x24] sm:$0xf]
    %v155 = vld [vmem:[%s1 + $0x28] sm:$0xf]
    %v156 = vld [vmem:[%s1 + $0x2c] sm:$0xf]
    %v157 = vld [vmem:[%s1 + $0x30] sm:$0xf]
    %v158 = vld [vmem:[%s1 + $0x34] sm:$0xf]
    %v159 = vld [vmem:[%s1 + $0x38] sm:$0xf]
    %v160 = vld [vmem:[%s1 + $0x3c] sm:$0xf]
    %v177 = vunpack.c.l.b16 %v145
    %v178 = vunpack.c.l.b16 %v146
    %v179 = vunpack.c.l.b16 %v147
    %v180 = vunpack.c.l.b16 %v148
    %v181 = vunpack.c.l.b16 %v149
    %v182 = vunpack.c.l.b16 %v150
    %v183 = vunpack.c.l.b16 %v151
    %v184 = vunpack.c.l.b16 %v152
    %v185 = vunpack.c.l.b16 %v153
    %v186 = vunpack.c.l.b16 %v154
    %v187 = vunpack.c.l.b16 %v155
    %v188 = vunpack.c.l.b16 %v156
    %v189 = vunpack.c.l.b16 %v157
    %v190 = vunpack.c.l.b16 %v158
    %v191 = vunpack.c.l.b16 %v159
    %v192 = vunpack.c.l.b16 %v160
    %v193 = vpack.c.b16 %v178, %v177
    %v194 = vpack.c.b16 %v180, %v179
    %v195 = vpack.c.b16 %v182, %v181
    %v196 = vpack.c.b16 %v184, %v183
    %v197 = vpack.c.b16 %v186, %v185
    %v198 = vpack.c.b16 %v188, %v187
    %v199 = vpack.c.b16 %v190, %v189
    %v200 = vpack.c.b16 %v192, %v191
    %209 = vmatprep.subr.bf16.mxu0 0
    %210 = vmatpush1.bf16.msra.mxu0 %v200
    %211 = vmatprep.subr.bf16.mxu0 0
    %212 = vmatpush1.bf16.msra.mxu0 %v199
    %213 = vmatprep.subr.bf16.mxu0 0
    %214 = vmatpush1.bf16.msra.mxu0 %v198
    %215 = vmatprep.subr.bf16.mxu0 0
    %216 = vmatpush1.bf16.msra.mxu0 %v197
    %217 = vmatprep.subr.bf16.mxu0 0
    %218 = vmatpush1.bf16.msra.mxu0 %v196
    %219 = vmatprep.subr.bf16.mxu0 0
    %220 = vmatpush1.bf16.msra.mxu0 %v195
    %221 = vmatprep.subr.bf16.mxu0 0
    %222 = vmatpush1.bf16.msra.mxu0 %v194
    %223 = vmatprep.subr.bf16.mxu0 0
    %224 = vmatpush1.bf16.msra.mxu0 %v193
    %225 = vmatprep.subr.bf16.mxu0 0
    %226 = vmatpush2.bf16.msra.mxu0 0
    %227 = vmatprep.subr.bf16.mxu0 0
    %228 = vmatpush2.bf16.msra.mxu0 0
    %229 = vmatprep.subr.bf16.mxu0 0
    %230 = vmatpush2.bf16.msra.mxu0 0
    %231 = vmatprep.subr.bf16.mxu0 0
    %232 = vmatpush2.bf16.msra.mxu0 0
    %233 = vmatprep.subr.bf16.mxu0 0
    %234 = vmatpush2.bf16.msra.mxu0 0
    %235 = vmatprep.subr.bf16.mxu0 0
    %236 = vmatpush2.bf16.msra.mxu0 0
    %237 = vmatprep.subr.bf16.mxu0 0
    %238 = vmatpush2.bf16.msra.mxu0 0
    %239 = vmatprep.subr.bf16.mxu0 0
    %240 = vmatpush2.bf16.msra.mxu0 0
    %241 = vmatprep.mubr.bf16.mxu0 0
    %242 = vmatmul.mubr.bf16.gmra.mxu0 %v137
    %v243 = vpop.f32.mrf.mxu0
    %v244 = vadd.f32 0.0, %v243
    %v245 = vpop.f32.mrf.mxu0
    %v246 = vpop.f32.mrf.mxu0
    %v247 = vadd.f32 0.0, %v246
    %v248 = vpop.f32.mrf.mxu0
    %249 = vmatprep.mubr.bf16.mxu0 0
    %250 = vmatmul.mubr.bf16.gmra.mxu0 %v138
    %v251 = vpop.f32.mrf.mxu0
    %v252 = vadd.f32 0.0, %v251
    %v253 = vpop.f32.mrf.mxu0
    %v254 = vpop.f32.mrf.mxu0
    %v255 = vadd.f32 0.0, %v254
    %v256 = vpop.f32.mrf.mxu0
    %257 = vmatprep.mubr.bf16.mxu0 0
    %258 = vmatmul.mubr.bf16.gmra.mxu0 %v139
    %v259 = vpop.f32.mrf.mxu0
    %v260 = vadd.f32 0.0, %v259
    %v261 = vpop.f32.mrf.mxu0
    %v262 = vpop.f32.mrf.mxu0
    %v263 = vadd.f32 0.0, %v262
    %v264 = vpop.f32.mrf.mxu0
    %265 = vmatprep.mubr.bf16.mxu0 0
    %266 = vmatmul.mubr.bf16.gmra.mxu0 %v140
    %v267 = vpop.f32.mrf.mxu0
    %v268 = vadd.f32 0.0, %v267
    %v269 = vpop.f32.mrf.mxu0
    %v270 = vpop.f32.mrf.mxu0
    %v271 = vadd.f32 0.0, %v270
    %v272 = vpop.f32.mrf.mxu0
    %273 = vmatprep.mubr.bf16.mxu0 0
    %274 = vmatmul.mubr.bf16.gmra.mxu0 %v141
    %v275 = vpop.f32.mrf.mxu0
    %v276 = vadd.f32 0.0, %v275
    %v277 = vpop.f32.mrf.mxu0
    %v278 = vpop.f32.mrf.mxu0
    %v279 = vadd.f32 0.0, %v278
    %v280 = vpop.f32.mrf.mxu0
    %281 = vmatprep.mubr.bf16.mxu0 0
    %282 = vmatmul.mubr.bf16.gmra.mxu0 %v142
    %v283 = vpop.f32.mrf.mxu0
    %v284 = vadd.f32 0.0, %v283
    %v285 = vpop.f32.mrf.mxu0
    %v286 = vpop.f32.mrf.mxu0
    %v287 = vadd.f32 0.0, %v286
    %v288 = vpop.f32.mrf.mxu0
    %289 = vmatprep.mubr.bf16.mxu0 0
    %290 = vmatmul.mubr.bf16.gmra.mxu0 %v143
    %v291 = vpop.f32.mrf.mxu0
    %v292 = vadd.f32 0.0, %v291
    %v293 = vpop.f32.mrf.mxu0
    %v294 = vpop.f32.mrf.mxu0
    %v295 = vadd.f32 0.0, %v294
    %v296 = vpop.f32.mrf.mxu0
    %297 = vmatprep.mubr.bf16.mxu0 0
    %298 = vmatmul.mubr.bf16.gmra.mxu0 %v144
    %v299 = vpop.f32.mrf.mxu0
    %v300 = vadd.f32 0.0, %v299
    %v301 = vpop.f32.mrf.mxu0
    %v302 = vpop.f32.mrf.mxu0
    %v303 = vadd.f32 0.0, %v302
    %v304 = vpop.f32.mrf.mxu0
    %305 = vdwg.mxu0
    %v306 = vpack.c.bf16 %v247, %v244
    %v307 = vpack.c.bf16 %v255, %v252
    %v308 = vpack.c.bf16 %v263, %v260
    %v309 = vpack.c.bf16 %v271, %v268
    %v310 = vpack.c.bf16 %v279, %v276
    %v311 = vpack.c.bf16 %v287, %v284
    %v312 = vpack.c.bf16 %v295, %v292
    %v313 = vpack.c.bf16 %v303, %v300
    %v314 = vld [vmem:[%s2] sm:$0xf]
    %v315 = vld [vmem:[%s2 + $0x4] sm:$0xf]
    %v316 = vld [vmem:[%s2 + $0x8] sm:$0xf]
    %v317 = vld [vmem:[%s2 + $0xc] sm:$0xf]
    %v318 = vld [vmem:[%s2 + $0x10] sm:$0xf]
    %v319 = vld [vmem:[%s2 + $0x14] sm:$0xf]
    %v320 = vld [vmem:[%s2 + $0x18] sm:$0xf]
    %v321 = vld [vmem:[%s2 + $0x1c] sm:$0xf]
    %v322 = vld [vmem:[%s2 + $0x20] sm:$0xf]
    %v323 = vld [vmem:[%s2 + $0x24] sm:$0xf]
    %v324 = vld [vmem:[%s2 + $0x28] sm:$0xf]
    %v325 = vld [vmem:[%s2 + $0x2c] sm:$0xf]
    %v326 = vld [vmem:[%s2 + $0x30] sm:$0xf]
    %v327 = vld [vmem:[%s2 + $0x34] sm:$0xf]
    %v328 = vld [vmem:[%s2 + $0x38] sm:$0xf]
    %v329 = vld [vmem:[%s2 + $0x3c] sm:$0xf]
    %v330 = vld [vmem:[%s3] sm:$0x1]
    %v332 = vlaneseq
    %v333 = vshrl.u32 %v332, 7
    %v334 = vsub.s32 0, %v333
    %v335 = vrot.slane %v330, %v334
    %v353 = vunpack.c.l.b16 %v314
    %v354 = vunpack.c.l.b16 %v315
    %v355 = vunpack.c.l.b16 %v316
    %v356 = vunpack.c.l.b16 %v317
    %v357 = vunpack.c.l.b16 %v318
    %v358 = vunpack.c.l.b16 %v319
    %v359 = vunpack.c.l.b16 %v320
    %v360 = vunpack.c.l.b16 %v321
    %v361 = vunpack.c.l.b16 %v322
    %v362 = vunpack.c.l.b16 %v323
    %v363 = vunpack.c.l.b16 %v324
    %v364 = vunpack.c.l.b16 %v325
    %v365 = vunpack.c.l.b16 %v326
    %v366 = vunpack.c.l.b16 %v327
    %v367 = vunpack.c.l.b16 %v328
    %v368 = vunpack.c.l.b16 %v329
    %v369 = vpack.c.b16 %v354, %v353
    %v370 = vpack.c.b16 %v356, %v355
    %v371 = vpack.c.b16 %v358, %v357
    %v372 = vpack.c.b16 %v360, %v359
    %v373 = vpack.c.b16 %v362, %v361
    %v374 = vpack.c.b16 %v364, %v363
    %v375 = vpack.c.b16 %v366, %v365
    %v376 = vpack.c.b16 %v368, %v367
    %385 = vmatprep.subr.bf16.mxu0 0
    %386 = vmatpush1.bf16.msra.mxu0 %v376
    %387 = vmatprep.subr.bf16.mxu0 0
    %388 = vmatpush1.bf16.msra.mxu0 %v375
    %389 = vmatprep.subr.bf16.mxu0 0
    %390 = vmatpush1.bf16.msra.mxu0 %v374
    %391 = vmatprep.subr.bf16.mxu0 0
    %392 = vmatpush1.bf16.msra.mxu0 %v373
    %393 = vmatprep.subr.bf16.mxu0 0
    %394 = vmatpush1.bf16.msra.mxu0 %v372
    %395 = vmatprep.subr.bf16.mxu0 0
    %396 = vmatpush1.bf16.msra.mxu0 %v371
    %397 = vmatprep.subr.bf16.mxu0 0
    %398 = vmatpush1.bf16.msra.mxu0 %v370
    %399 = vmatprep.subr.bf16.mxu0 0
    %400 = vmatpush1.bf16.msra.mxu0 %v369
    %401 = vmatprep.subr.bf16.mxu0 0
    %402 = vmatpush2.bf16.msra.mxu0 0
    %403 = vmatprep.subr.bf16.mxu0 0
    %404 = vmatpush2.bf16.msra.mxu0 0
    %405 = vmatprep.subr.bf16.mxu0 0
    %406 = vmatpush2.bf16.msra.mxu0 0
    %407 = vmatprep.subr.bf16.mxu0 0
    %408 = vmatpush2.bf16.msra.mxu0 0
    %409 = vmatprep.subr.bf16.mxu0 0
    %410 = vmatpush2.bf16.msra.mxu0 0
    %411 = vmatprep.subr.bf16.mxu0 0
    %412 = vmatpush2.bf16.msra.mxu0 0
    %413 = vmatprep.subr.bf16.mxu0 0
    %414 = vmatpush2.bf16.msra.mxu0 0
    %415 = vmatprep.subr.bf16.mxu0 0
    %416 = vmatpush2.bf16.msra.mxu0 0
    %417 = vmatprep.mubr.bf16.mxu0 0
    %418 = vmatmul.mubr.bf16.gmra.mxu0 %v306
    %v419 = vpop.f32.mrf.mxu0
    %v420 = vadd.f32 %v335, %v419
    %v421 = vpop.f32.mrf.mxu0
    %v422 = vpop.f32.mrf.mxu0
    %v423 = vadd.f32 %v335, %v422
    %v424 = vpop.f32.mrf.mxu0
    %425 = vmatprep.mubr.bf16.mxu0 0
    %426 = vmatmul.mubr.bf16.gmra.mxu0 %v307
    %v427 = vpop.f32.mrf.mxu0
    %v428 = vadd.f32 %v335, %v427
    %v429 = vpop.f32.mrf.mxu0
    %v430 = vpop.f32.mrf.mxu0
    %v431 = vadd.f32 %v335, %v430
    %v432 = vpop.f32.mrf.mxu0
    %433 = vmatprep.mubr.bf16.mxu0 0
    %434 = vmatmul.mubr.bf16.gmra.mxu0 %v308
    %v435 = vpop.f32.mrf.mxu0
    %v436 = vadd.f32 %v335, %v435
    %v437 = vpop.f32.mrf.mxu0
    %v438 = vpop.f32.mrf.mxu0
    %v439 = vadd.f32 %v335, %v438
    %v440 = vpop.f32.mrf.mxu0
    %441 = vmatprep.mubr.bf16.mxu0 0
    %442 = vmatmul.mubr.bf16.gmra.mxu0 %v309
    %v443 = vpop.f32.mrf.mxu0
    %v444 = vadd.f32 %v335, %v443
    %v445 = vpop.f32.mrf.mxu0
    %v446 = vpop.f32.mrf.mxu0
    %v447 = vadd.f32 %v335, %v446
    %v448 = vpop.f32.mrf.mxu0
    %449 = vmatprep.mubr.bf16.mxu0 0
    %450 = vmatmul.mubr.bf16.gmra.mxu0 %v310
    %v451 = vpop.f32.mrf.mxu0
    %v452 = vadd.f32 %v335, %v451
    %v453 = vpop.f32.mrf.mxu0
    %v454 = vpop.f32.mrf.mxu0
    %v455 = vadd.f32 %v335, %v454
    %v456 = vpop.f32.mrf.mxu0
    %457 = vmatprep.mubr.bf16.mxu0 0
    %458 = vmatmul.mubr.bf16.gmra.mxu0 %v311
    %v459 = vpop.f32.mrf.mxu0
    %v460 = vadd.f32 %v335, %v459
    %v461 = vpop.f32.mrf.mxu0
    %v462 = vpop.f32.mrf.mxu0
    %v463 = vadd.f32 %v335, %v462
    %v464 = vpop.f32.mrf.mxu0
    %465 = vmatprep.mubr.bf16.mxu0 0
    %466 = vmatmul.mubr.bf16.gmra.mxu0 %v312
    %v467 = vpop.f32.mrf.mxu0
    %v468 = vadd.f32 %v335, %v467
    %v469 = vpop.f32.mrf.mxu0
    %v470 = vpop.f32.mrf.mxu0
    %v471 = vadd.f32 %v335, %v470
    %v472 = vpop.f32.mrf.mxu0
    %473 = vmatprep.mubr.bf16.mxu0 0
    %474 = vmatmul.mubr.bf16.gmra.mxu0 %v313
    %v475 = vpop.f32.mrf.mxu0
    %v476 = vadd.f32 %v335, %v475
    %v477 = vpop.f32.mrf.mxu0
    %v478 = vpop.f32.mrf.mxu0
    %v479 = vadd.f32 %v335, %v478
    %v480 = vpop.f32.mrf.mxu0
    %481 = vdwg.mxu0
    %v482 = vmax.f32 %v420, 0.0
    %v483 = vmax.f32 %v423, 0.0
    %v484 = vmax.f32 %v428, 0.0
    %v485 = vmax.f32 %v431, 0.0
    %v486 = vmax.f32 %v436, 0.0
    %v487 = vmax.f32 %v439, 0.0
    %v488 = vmax.f32 %v444, 0.0
    %v489 = vmax.f32 %v447, 0.0
    %v490 = vmax.f32 %v452, 0.0
    %v491 = vmax.f32 %v455, 0.0
    %v492 = vmax.f32 %v460, 0.0
    %v493 = vmax.f32 %v463, 0.0
    %v494 = vmax.f32 %v468, 0.0
    %v495 = vmax.f32 %v471, 0.0
    %v496 = vmax.f32 %v476, 0.0
    %v497 = vmax.f32 %v479, 0.0
    %v498 = vrot.slane %v482, 4
    %v499 = vadd.f32 %v482, %v498
    %v500 = vrot.slane %v499, 2
    %v501 = vadd.f32 %v499, %v500
    %v502 = vrot.slane %v501, 1
    %v503 = vadd.f32 %v501, %v502
    %v504 = vrot.slane %v483, 4
    %v505 = vadd.f32 %v483, %v504
    %v506 = vrot.slane %v505, 2
    %v507 = vadd.f32 %v505, %v506
    %v508 = vrot.slane %v507, 1
    %v509 = vadd.f32 %v507, %v508
    %v510 = vrot.slane %v484, 4
    %v511 = vadd.f32 %v484, %v510
    %v512 = vrot.slane %v511, 2
    %v513 = vadd.f32 %v511, %v512
    %v514 = vrot.slane %v513, 1
    %v515 = vadd.f32 %v513, %v514
    %v516 = vrot.slane %v485, 4
    %v517 = vadd.f32 %v485, %v516
    %v518 = vrot.slane %v517, 2
    %v519 = vadd.f32 %v517, %v518
    %v520 = vrot.slane %v519, 1
    %v521 = vadd.f32 %v519, %v520
    %v522 = vrot.slane %v486, 4
    %v523 = vadd.f32 %v486, %v522
    %v524 = vrot.slane %v523, 2
    %v525 = vadd.f32 %v523, %v524
    %v526 = vrot.slane %v525, 1
    %v527 = vadd.f32 %v525, %v526
    %v528 = vrot.slane %v487, 4
    %v529 = vadd.f32 %v487, %v528
    %v530 = vrot.slane %v529, 2
    %v531 = vadd.f32 %v529, %v530
    %v532 = vrot.slane %v531, 1
    %v533 = vadd.f32 %v531, %v532
    %v534 = vrot.slane %v488, 4
    %v535 = vadd.f32 %v488, %v534
    %v536 = vrot.slane %v535, 2
    %v537 = vadd.f32 %v535, %v536
    %v538 = vrot.slane %v537, 1
    %v539 = vadd.f32 %v537, %v538
    %v540 = vrot.slane %v489, 4
    %v541 = vadd.f32 %v489, %v540
    %v542 = vrot.slane %v541, 2
    %v543 = vadd.f32 %v541, %v542
    %v544 = vrot.slane %v543, 1
    %v545 = vadd.f32 %v543, %v544
    %v546 = vrot.slane %v490, 4
    %v547 = vadd.f32 %v490, %v546
    %v548 = vrot.slane %v547, 2
    %v549 = vadd.f32 %v547, %v548
    %v550 = vrot.slane %v549, 1
    %v551 = vadd.f32 %v549, %v550
    %v552 = vrot.slane %v491, 4
    %v553 = vadd.f32 %v491, %v552
    %v554 = vrot.slane %v553, 2
    %v555 = vadd.f32 %v553, %v554
    %v556 = vrot.slane %v555, 1
    %v557 = vadd.f32 %v555, %v556
    %v558 = vrot.slane %v492, 4
    %v559 = vadd.f32 %v492, %v558
    %v560 = vrot.slane %v559, 2
    %v561 = vadd.f32 %v559, %v560
    %v562 = vrot.slane %v561, 1
    %v563 = vadd.f32 %v561, %v562
    %v564 = vrot.slane %v493, 4
    %v565 = vadd.f32 %v493, %v564
    %v566 = vrot.slane %v565, 2
    %v567 = vadd.f32 %v565, %v566
    %v568 = vrot.slane %v567, 1
    %v569 = vadd.f32 %v567, %v568
    %v570 = vrot.slane %v494, 4
    %v571 = vadd.f32 %v494, %v570
    %v572 = vrot.slane %v571, 2
    %v573 = vadd.f32 %v571, %v572
    %v574 = vrot.slane %v573, 1
    %v575 = vadd.f32 %v573, %v574
    %v576 = vrot.slane %v495, 4
    %v577 = vadd.f32 %v495, %v576
    %v578 = vrot.slane %v577, 2
    %v579 = vadd.f32 %v577, %v578
    %v580 = vrot.slane %v579, 1
    %v581 = vadd.f32 %v579, %v580
    %v582 = vrot.slane %v496, 4
    %v583 = vadd.f32 %v496, %v582
    %v584 = vrot.slane %v583, 2
    %v585 = vadd.f32 %v583, %v584
    %v586 = vrot.slane %v585, 1
    %v587 = vadd.f32 %v585, %v586
    %v588 = vrot.slane %v497, 4
    %v589 = vadd.f32 %v497, %v588
    %v590 = vrot.slane %v589, 2
    %v591 = vadd.f32 %v589, %v590
    %v592 = vrot.slane %v591, 1
    %v593 = vadd.f32 %v591, %v592
    %v594 = vmul.f32 %v503, 0.125
    %v595 = vmul.f32 %v509, 0.125
    %v596 = vmul.f32 %v515, 0.125
    %v597 = vmul.f32 %v521, 0.125
    %v598 = vmul.f32 %v527, 0.125
    %v599 = vmul.f32 %v533, 0.125
    %v600 = vmul.f32 %v539, 0.125
    %v601 = vmul.f32 %v545, 0.125
    %v602 = vmul.f32 %v551, 0.125
    %v603 = vmul.f32 %v557, 0.125
    %v604 = vmul.f32 %v563, 0.125
    %v605 = vmul.f32 %v569, 0.125
    %v606 = vmul.f32 %v575, 0.125
    %v607 = vmul.f32 %v581, 0.125
    %v608 = vmul.f32 %v587, 0.125
    %v609 = vmul.f32 %v593, 0.125
    %v610 = vpack.c.bf16 %v594, %v594
    %v611 = vpack.c.bf16 %v595, %v595
    %v612 = vpack.c.bf16 %v596, %v596
    %v613 = vpack.c.bf16 %v597, %v597
    %v614 = vpack.c.bf16 %v598, %v598
    %v615 = vpack.c.bf16 %v599, %v599
    %v616 = vpack.c.bf16 %v600, %v600
    %v617 = vpack.c.bf16 %v601, %v601
    %v618 = vpack.c.bf16 %v602, %v602
    %v619 = vpack.c.bf16 %v603, %v603
    %v620 = vpack.c.bf16 %v604, %v604
    %v621 = vpack.c.bf16 %v605, %v605
    %v622 = vpack.c.bf16 %v606, %v606
    %v623 = vpack.c.bf16 %v607, %v607
    %v624 = vpack.c.bf16 %v608, %v608
    %v625 = vpack.c.bf16 %v609, %v609
    %v626 = vld [vmem:[#allocation2] sm:$0xf]
    %v627 = vld [vmem:[#allocation2 + $0x4] sm:$0xf]
    %v628 = vld [vmem:[#allocation2 + $0x8] sm:$0xf]
    %v629 = vld [vmem:[#allocation2 + $0xc] sm:$0xf]
    %v630 = vld [vmem:[#allocation2 + $0x10] sm:$0xf]
    %v631 = vld [vmem:[#allocation2 + $0x14] sm:$0xf]
    %v632 = vld [vmem:[#allocation2 + $0x18] sm:$0xf]
    %v633 = vld [vmem:[#allocation2 + $0x1c] sm:$0xf]
    %v634 = vld [vmem:[#allocation2 + $0x20] sm:$0xf]
    %v635 = vld [vmem:[#allocation2 + $0x24] sm:$0xf]
    %v636 = vld [vmem:[#allocation2 + $0x28] sm:$0xf]
    %v637 = vld [vmem:[#allocation2 + $0x2c] sm:$0xf]
    %v638 = vld [vmem:[#allocation2 + $0x30] sm:$0xf]
    %v639 = vld [vmem:[#allocation2 + $0x34] sm:$0xf]
    %v640 = vld [vmem:[#allocation2 + $0x38] sm:$0xf]
    %v641 = vld [vmem:[#allocation2 + $0x3c] sm:$0xf]
    %v642 = vld [vmem:[%s5] sm:$0x1]
    %v644 = vlaneseq
    %v645 = vshrl.u32 %v644, 7
    %v646 = vsub.s32 0, %v645
    %v647 = vrot.slane %v642, %v646
    %v665 = vunpack.c.l.b16 %v610
    %v666 = vunpack.c.l.b16 %v611
    %v667 = vunpack.c.l.b16 %v612
    %v668 = vunpack.c.l.b16 %v613
    %v669 = vunpack.c.l.b16 %v614
    %v670 = vunpack.c.l.b16 %v615
    %v671 = vunpack.c.l.b16 %v616
    %v672 = vunpack.c.l.b16 %v617
    %v673 = vunpack.c.l.b16 %v618
    %v674 = vunpack.c.l.b16 %v619
    %v675 = vunpack.c.l.b16 %v620
    %v676 = vunpack.c.l.b16 %v621
    %v677 = vunpack.c.l.b16 %v622
    %v678 = vunpack.c.l.b16 %v623
    %v679 = vunpack.c.l.b16 %v624
    %v680 = vunpack.c.l.b16 %v625
    %vm681 = vcmask 1041409
    %v682 = vsel %vm681, %v666, %v665
    %vm683 = vcmask 1042434
    %v684 = vsel %vm683, %v667, %v682
    %vm685 = vcmask 1043459
    %v686 = vsel %vm685, %v668, %v684
    %vm687 = vcmask 1044484
    %v688 = vsel %vm687, %v669, %v686
    %vm689 = vcmask 1045509
    %v690 = vsel %vm689, %v670, %v688
    %vm691 = vcmask 1046534
    %v692 = vsel %vm691, %v671, %v690
    %vm693 = vcmask 1047559
    %v694 = vsel %vm693, %v672, %v692
    %v695 = vsel %vm681, %v674, %v673
    %v696 = vsel %vm683, %v675, %v695
    %v697 = vsel %vm685, %v676, %v696
    %v698 = vsel %vm687, %v677, %v697
    %v699 = vsel %vm689, %v678, %v698
    %v700 = vsel %vm691, %v679, %v699
    %v701 = vsel %vm693, %v680, %v700
    %v702 = vpack.c.b16 %v701, %v694
    %v720 = vunpack.c.l.b16 %v626
    %v721 = vunpack.c.l.b16 %v627
    %v722 = vunpack.c.l.b16 %v628
    %v723 = vunpack.c.l.b16 %v629
    %v724 = vunpack.c.l.b16 %v630
    %v725 = vunpack.c.l.b16 %v631
    %v726 = vunpack.c.l.b16 %v632
    %v727 = vunpack.c.l.b16 %v633
    %v728 = vunpack.c.l.b16 %v634
    %v729 = vunpack.c.l.b16 %v635
    %v730 = vunpack.c.l.b16 %v636
    %v731 = vunpack.c.l.b16 %v637
    %v732 = vunpack.c.l.b16 %v638
    %v733 = vunpack.c.l.b16 %v639
    %v734 = vunpack.c.l.b16 %v640
    %v735 = vunpack.c.l.b16 %v641
    %v736 = vpack.c.b16 %v721, %v720
    %v737 = vpack.c.b16 %v723, %v722
    %v738 = vpack.c.b16 %v725, %v724
    %v739 = vpack.c.b16 %v727, %v726
    %v740 = vpack.c.b16 %v729, %v728
    %v741 = vpack.c.b16 %v731, %v730
    %v742 = vpack.c.b16 %v733, %v732
    %v743 = vpack.c.b16 %v735, %v734
    %752 = vmatprep.subr.bf16.mxu0 0
    %753 = vmatpush1.bf16.msra.mxu0 %v743
    %754 = vmatprep.subr.bf16.mxu0 0
    %755 = vmatpush1.bf16.msra.mxu0 %v742
    %756 = vmatprep.subr.bf16.mxu0 0
    %757 = vmatpush1.bf16.msra.mxu0 %v741
    %758 = vmatprep.subr.bf16.mxu0 0
    %759 = vmatpush1.bf16.msra.mxu0 %v740
    %760 = vmatprep.subr.bf16.mxu0 0
    %761 = vmatpush1.bf16.msra.mxu0 %v739
    %762 = vmatprep.subr.bf16.mxu0 0
    %763 = vmatpush1.bf16.msra.mxu0 %v738
    %764 = vmatprep.subr.bf16.mxu0 0
    %765 = vmatpush1.bf16.msra.mxu0 %v737
    %766 = vmatprep.subr.bf16.mxu0 0
    %767 = vmatpush1.bf16.msra.mxu0 %v736
    %768 = vmatprep.subr.bf16.mxu0 0
    %769 = vmatpush2.bf16.msra.mxu0 0
    %770 = vmatprep.subr.bf16.mxu0 0
    %771 = vmatpush2.bf16.msra.mxu0 0
    %772 = vmatprep.subr.bf16.mxu0 0
    %773 = vmatpush2.bf16.msra.mxu0 0
    %774 = vmatprep.subr.bf16.mxu0 0
    %775 = vmatpush2.bf16.msra.mxu0 0
    %776 = vmatprep.subr.bf16.mxu0 0
    %777 = vmatpush2.bf16.msra.mxu0 0
    %778 = vmatprep.subr.bf16.mxu0 0
    %779 = vmatpush2.bf16.msra.mxu0 0
    %780 = vmatprep.subr.bf16.mxu0 0
    %781 = vmatpush2.bf16.msra.mxu0 0
    %782 = vmatprep.subr.bf16.mxu0 0
    %783 = vmatpush2.bf16.msra.mxu0 0
    %784 = vmatprep.mubr.bf16.mxu0 0
    %785 = vmatmul.mubr.bf16.gmra.mxu0 %v702
    %v786 = vpop.f32.mrf.mxu0
    %v787 = vadd.f32 %v647, %v786
    %v788 = vpop.f32.mrf.mxu0
    %v789 = vpop.f32.mrf.mxu0
    %v790 = vadd.f32 %v647, %v789
    %v791 = vpop.f32.mrf.mxu0
    %792 = vdwg.mxu0
    %793 = vst [vmem:[#allocation5] sm:$0xff] %v787
    %794 = vst [vmem:[#allocation5 + $0x8] sm:$0xff] %v790
    // Predicated region
    $region30: #{tpu_custom_call.1} parent=1 // pred_check
      _
    $region31: #{tpu_custom_call.1} parent=1 // pred_check_branch
      %796 = sbr.rel (0) target = $region33
    $region32: #{tpu_custom_call.1} parent=1 // pred_region
      %s798 = ssub.s32 256, 256
      %799 = vsyncadd [#allocation4], %s798
      %s800 = sshll.u32 [#allocation5], 4
      %s801 = int_to_ptr.vmem [resolvable:$true] %s800
      %806 = dma.vmem_to_hbm [thread:$0]  %s801, 256, %s6, [#allocation4], 128, 128, 8
    $region33: #{tpu_custom_call.1} parent=1 // pred_fallthru
      _
    // Predicated region
    $region34: #{tpu_custom_call.1} parent=1 // pred_check
      _
    $region35: #{tpu_custom_call.1} parent=1 // pred_check_branch
      %808 = sbr.rel (0) target = $region37
    $region36: #{tpu_custom_call.1} parent=1 // pred_region
      %809 = dma.done [#allocation4], 256
    $region37: #{tpu_custom_call.1} parent=1 // pred_fallthru
      _
    %810 = vsyncpa [#allocation3], 1
    %811 = vsyncpa [#allocation4], 1

</llo_original>
